<compile_context>
chip_gen: v6e
topology: v6e:2x2x1
jax: 0.10.0
libtpu: 0.0.40
codegen_flags: <defaults>
</compile_context>

<pallas_src>
import functools

import jax
import jax.numpy as jnp
from jax.experimental import pallas as pl
from jax.experimental.pallas import tpu as pltpu

# small synthetic dims
VOCAB = 32
HIDDEN = 32
SEQ = 8
VPAD = 128            # lane-dense padded vocab (full 128-lane vreg width)
NEG_PAD = -1e30       # padded logit columns -> ~ -inf, contribute 0 to softmax

assert VOCAB <= VPAD and HIDDEN <= VPAD


def _r8(n):
    return ((n + 7) // 8) * 8


# Row offsets of each piece inside the single packed constant slab [SLAB_ROWS, 128].
EIH_OFF = 0                              # rows [0, VOCAB):   embed @ W_ih   (lanes 0..H-1)
WHH_OFF = EIH_OFF + _r8(VOCAB)           # rows [.., +HIDDEN): W_hh           (lanes 0..H-1)
WOUT_OFF = WHH_OFF + _r8(HIDDEN)         # rows [.., +HIDDEN): W_out padded   (full 128 lanes)
BIAS_OFF = WOUT_OFF + _r8(HIDDEN)        # row BIAS_OFF   : b_ih + b_hh       (lanes 0..H-1)
                                         # row BIAS_OFF+1 : b_out padded with -1e30
SLAB_ROWS = _r8(BIAS_OFF + 2)            # pad total rows to a multiple of 8


def _rnn_lm_kernel(*refs, stateful):
    """Single-invocation kernel, whole problem resident in VMEM.

    refs (stateless): ids_ref, slab_ref, out_ref, hs_ref
    refs (stateful) : ids_ref, slab_ref, h0_ref, out_ref, hs_ref

    ids_ref : [T, 1]            int32 token ids
    slab_ref: [SLAB_ROWS, 128]  packed constants (see offsets above)
    h0_ref  : [1, H]            initial state (stateful variant only)
    out_ref : [2T, 128]         rows 0..T-1 = log-probs, row T = h_last (padded)
    hs_ref  : [T, H]            VMEM scratch for the hidden-state rows
    """
    if stateful:
        ids_ref, slab_ref, h0_ref, out_ref, hs_ref = refs
    else:
        ids_ref, slab_ref, out_ref, hs_ref = refs
        h0_ref = None

    T = ids_ref.shape[0]

    # --- unpack the single packed constant slab (static slices, loaded once) ---
    eih = slab_ref[EIH_OFF:EIH_OFF + VOCAB, 0:HIDDEN]        # [V, H]  embed @ W_ih
    whh = slab_ref[WHH_OFF:WHH_OFF + HIDDEN, 0:HIDDEN]       # [H, H]
    wout = slab_ref[WOUT_OFF:WOUT_OFF + HIDDEN, :]           # [H, VP] (pad cols = 0)
    bhid = slab_ref[BIAS_OFF:BIAS_OFF + 1, 0:HIDDEN]         # [1, H]  b_ih + b_hh
    bout = slab_ref[BIAS_OFF + 1:BIAS_OFF + 2, :]            # [1, VP] (pad lanes = -1e30)

    # --- in-kernel embedding gather + input projection (one MXU matmul) ---
    ids = jnp.clip(ids_ref[...], 0, VOCAB - 1)               # clamp like jnp.take
    lane = jax.lax.broadcasted_iota(jnp.int32, (T, VOCAB), 1)
    onehot = (lane == ids).astype(jnp.float32)               # [T, V]
    # pre_t = emb(x_t) @ W_ih + b_ih + b_hh   (non-recurrent, all t at once)
    pre = jnp.dot(onehot, eih, preferred_element_type=jnp.float32) + bhid  # [T, H]

    # --- fully unrolled recurrence; h stays in vregs, rows parked in scratch ---
    if stateful:
        h = h0_ref[...]                                      # [1, H]
    else:
        h = jnp.zeros((1, HIDDEN), jnp.float32)              # no h0 DMA on common path
    for t in range(T):                                       # T static -> full unroll
        z = pre[t:t + 1, :] + jnp.dot(h, whh, preferred_element_type=jnp.float32)
        h = jnp.tanh(z)
        hs_ref[t:t + 1, :] = h                               # row store, off the chain

    # --- output projection (lane-dense) + log-softmax ---
    hs = hs_ref[...]                                         # [T, H]
    logits = jnp.dot(hs, wout, preferred_element_type=jnp.float32) + bout  # [T, VP]
    m = jnp.max(logits, axis=-1, keepdims=True)
    lse = m + jnp.log(jnp.sum(jnp.exp(logits - m), axis=-1, keepdims=True))
    logp = logits - lse                                      # [T, VP]

    # --- single merged, unmasked, lane-dense output store ---
    hrow = jnp.concatenate([h, jnp.zeros((1, VPAD - HIDDEN), jnp.float32)], axis=1)
    tail = jnp.concatenate([hrow, jnp.zeros((T - 1, VPAD), jnp.float32)], axis=0)
    out_ref[...] = jnp.concatenate([logp, tail], axis=0)     # [2T, VP]


_VMEM = pl.BlockSpec(memory_space=pltpu.MemorySpace.VMEM)


@jax.jit
def _run_stateless(ids, slab):
    T = ids.shape[0]
    out = pl.pallas_call(
        functools.partial(_rnn_lm_kernel, stateful=False),
        out_shape=jax.ShapeDtypeStruct((2 * T, VPAD), jnp.float32),
        in_specs=[_VMEM, _VMEM],
        out_specs=_VMEM,
        scratch_shapes=[pltpu.VMEM((T, HIDDEN), jnp.float32)],
    )(ids, slab)
    return out[:T, :VOCAB], out[T:T + 1, :HIDDEN]


@jax.jit
def _run_stateful(ids, slab, h0):
    T = ids.shape[0]
    out = pl.pallas_call(
        functools.partial(_rnn_lm_kernel, stateful=True),
        out_shape=jax.ShapeDtypeStruct((2 * T, VPAD), jnp.float32),
        in_specs=[_VMEM, _VMEM, _VMEM],
        out_specs=_VMEM,
        scratch_shapes=[pltpu.VMEM((T, HIDDEN), jnp.float32)],
    )(ids, slab, h0)
    return out[:T, :VOCAB], out[T:T + 1, :HIDDEN]


class BasicLM:
    """JAX/Pallas port of eteh BasicLM wrapping a simple RNN LM."""

    def __init__(self, params):
        self.params = params
        # One-time host-side parameter prep: fold W_ih into the embedding
        # table, merge the two hidden biases, pad output to 128 vocab lanes,
        # and pack EVERYTHING into one lane-dense f32 slab -> one input DMA.
        eih = params["embed"] @ params["wih"]                          # [V, H]
        bhid = (params["bih"] + params["bhh"])[0]                      # [H]
        bout_row = jnp.full((VPAD,), NEG_PAD, jnp.float32)
        bout_row = bout_row.at[0:VOCAB].set(params["bout"][0])         # [VP]

        slab = jnp.zeros((SLAB_ROWS, VPAD), jnp.float32)
        slab = slab.at[EIH_OFF:EIH_OFF + VOCAB, 0:HIDDEN].set(eih)
        slab = slab.at[WHH_OFF:WHH_OFF + HIDDEN, 0:HIDDEN].set(params["whh"])
        slab = slab.at[WOUT_OFF:WOUT_OFF + HIDDEN, 0:VOCAB].set(params["wout"])
        slab = slab.at[BIAS_OFF, 0:HIDDEN].set(bhid)
        slab = slab.at[BIAS_OFF + 1, :].set(bout_row)
        self._slab = slab

    # predict(x) -> (state, log_softmax(logits)) via the fused kernel.
    def predict(self, x, state=None):
        ids = jnp.asarray(x, dtype=jnp.int32).reshape(-1, 1)
        if state is None:
            logp, h_last = _run_stateless(ids, self._slab)
        else:
            h0 = jnp.asarray(state, jnp.float32).reshape(1, HIDDEN)
            logp, h_last = _run_stateful(ids, self._slab, h0)
        return h_last, logp

    def score(self, x, idx, state=None):
        state, y = self.predict(x, state)
        # device scalar; no forced host sync (caller can float() if needed)
        return y[-1, idx], state

    def rescore(self, x):
        x = jnp.asarray(x, dtype=jnp.int32)
        y_out = x[1:]
        _, x_out = self.predict(x, state=None)
        picked = jnp.take_along_axis(x_out[: y_out.shape[0]],
                                     y_out[:, None], axis=1)
        return jnp.sum(picked) / (y_out.shape[0] + 1)

    # TODO(synk): forward_onehot / load_state_dict / to_device are host-side
    # plumbing of the inner model and are not part of the Pallas hot path.


def _init_params(key):
    ks = jax.random.split(key, 7)
    s = 0.1
    return {
        "embed": s * jax.random.normal(ks[0], (VOCAB, HIDDEN), jnp.float32),
        "wih":   s * jax.random.normal(ks[1], (HIDDEN, HIDDEN), jnp.float32),
        "whh":   s * jax.random.normal(ks[2], (HIDDEN, HIDDEN), jnp.float32),
        "bih":   s * jax.random.normal(ks[3], (1, HIDDEN), jnp.float32),
        "bhh":   s * jax.random.normal(ks[4], (1, HIDDEN), jnp.float32),
        "wout":  s * jax.random.normal(ks[5], (HIDDEN, VOCAB), jnp.float32),
        "bout":  s * jax.random.normal(ks[6], (1, VOCAB), jnp.float32),
    }


def _reference_forward(params, x_ids, h0=None):
    """Plain-JAX reference matching the module semantics."""
    emb = jnp.take(params["embed"], x_ids, axis=0)          # [T, H]
    if h0 is None:
        h0 = jnp.zeros((1, HIDDEN), jnp.float32)

    def step(h, e):
        h_new = jnp.tanh(e[None, :] @ params["wih"] + params["bih"]
                         + h @ params["whh"] + params["bhh"])
        return h_new, h_new[0]

    h_last, hs = jax.lax.scan(step, h0, emb)
    logits = hs @ params["wout"] + params["bout"]
    return h_last, jax.nn.log_softmax(logits, axis=-1)


if __name__ == "__main__":
    key = jax.random.PRNGKey(0)
    pkey, xkey = jax.random.split(key)

    params = _init_params(pkey)
    lm = BasicLM(params)

    # deterministic token ids, seq=8
    x = jax.random.randint(xkey, (SEQ,), 0, VOCAB, dtype=jnp.int32)

    # stateless (common) path
    state, logp = lm.predict(x, state=None)
    jax.block_until_ready((state, logp))
    assert logp.shape == (SEQ, VOCAB)
    assert state.shape == (1, HIDDEN)
    # log_softmax rows must sum to 1 in prob space — padded vocab lanes and the
    # padded rows of the merged output slab must not have leaked in.
    assert bool(jnp.allclose(jnp.sum(jnp.exp(logp), axis=-1), 1.0, atol=1e-4))

    h_ref, logp_ref_val = _reference_forward(params, x)
    assert bool(jnp.allclose(logp, logp_ref_val, atol=1e-2, rtol=1e-2))
    assert bool(jnp.allclose(state, h_ref, atol=1e-2, rtol=1e-2))

    # stateful path (second kernel variant): continue decoding from h_T
    state2, logp2 = lm.predict(x, state=state)
    h_ref2, logp_ref2 = _reference_forward(params, x, h0=h_ref)
    assert bool(jnp.allclose(logp2, logp_ref2, atol=1e-2, rtol=1e-2))
    assert bool(jnp.allclose(state2, h_ref2, atol=1e-2, rtol=1e-2))

    # exercise score() / rescore() paths (vectorized, no host loop)
    s, _ = lm.score(x, idx=3)
    r = lm.rescore(x)
    jax.block_until_ready((s, r))

    print("KERNEL_OK")
</pallas_src>

<mosaic_0001>
module attributes {stable_mosaic.version = 11 : i64} {
  func.func @_rnn_lm_kernel(%arg0: memref<8x1xi32, #tpu.memory_space<vmem>>, %arg1: memref<104x128xf32, #tpu.memory_space<vmem>>, %arg2: memref<16x128xf32, #tpu.memory_space<vmem>>, %arg3: memref<8x32xf32, #tpu.memory_space<vmem>>) attributes {dimension_semantics = [], scalar_prefetch = 0 : i64, scratch_operands = 1 : i64, tpu.core_type = #tpu.core_type<tc>} {
    %c0 = arith.constant 0 : index
    %c0_0 = arith.constant 0 : index
    %0 = vector.load %arg1[%c0, %c0_0] : memref<104x128xf32, #tpu.memory_space<vmem>>, vector<32x32xf32>
    %c32 = arith.constant 32 : index
    %c0_1 = arith.constant 0 : index
    %1 = vector.load %arg1[%c32, %c0_1] : memref<104x128xf32, #tpu.memory_space<vmem>>, vector<32x32xf32>
    %c64 = arith.constant 64 : index
    %c0_2 = arith.constant 0 : index
    %2 = vector.load %arg1[%c64, %c0_2] : memref<104x128xf32, #tpu.memory_space<vmem>>, vector<32x128xf32>
    %c96 = arith.constant 96 : index
    %c0_3 = arith.constant 0 : index
    %3 = vector.load %arg1[%c96, %c0_3] : memref<104x128xf32, #tpu.memory_space<vmem>>, vector<1x32xf32>
    %c97 = arith.constant 97 : index
    %c0_4 = arith.constant 0 : index
    %4 = vector.load %arg1[%c97, %c0_4] : memref<104x128xf32, #tpu.memory_space<vmem>>, vector<1x128xf32>
    %c0_5 = arith.constant 0 : index
    %c0_6 = arith.constant 0 : index
    %5 = vector.load %arg0[%c0_5, %c0_6] : memref<8x1xi32, #tpu.memory_space<vmem>>, vector<8x1xi32>
    %c0_i32 = arith.constant 0 : i32
    %c31_i32 = arith.constant 31 : i32
    %6 = vector.broadcast %c0_i32 : i32 to vector<8x1xi32>
    %7 = arith.maxsi %6, %5 : vector<8x1xi32>
    %8 = vector.broadcast %c31_i32 : i32 to vector<8x1xi32>
    %9 = arith.minsi %8, %7 : vector<8x1xi32>
    %10 = tpu.iota {dimensions = array<i32: 1>} : vector<8x32xi32>
    %11 = vector.broadcast %9 : vector<8x1xi32> to vector<8x32xi32>
    %12 = arith.cmpi eq, %10, %11 : vector<8x32xi32>
    %13 = arith.extui %12 : vector<8x32xi1> to vector<8x32xi32>
    %14 = arith.sitofp %13 : vector<8x32xi32> to vector<8x32xf32>
    %cst = arith.constant dense<0.000000e+00> : vector<8x32xf32>
    %15 = tpu.matmul %14, %0, %cst {dimension_numbers = #tpu.dot_dimension_numbers<[1], [0], [0], [1], [0, 0, 1, 1], [], []>} : vector<8x32xf32>, vector<32x32xf32>, vector<8x32xf32> -> vector<8x32xf32>
    %16 = vector.broadcast %3 : vector<1x32xf32> to vector<8x32xf32>
    %17 = arith.addf %15, %16 : vector<8x32xf32>
    %cst_7 = arith.constant 0.000000e+00 : f32
    %18 = vector.broadcast %cst_7 : f32 to vector<1x32xf32>
    %19 = vector.extract_strided_slice %17 {offsets = [0, 0], sizes = [1, 32], strides = [1, 1]} : vector<8x32xf32> to vector<1x32xf32>
    %cst_8 = arith.constant dense<0.000000e+00> : vector<1x32xf32>
    %20 = tpu.matmul %18, %1, %cst_8 {dimension_numbers = #tpu.dot_dimension_numbers<[1], [0], [0], [1], [0, 0, 1, 1], [], []>} : vector<1x32xf32>, vector<32x32xf32>, vector<1x32xf32> -> vector<1x32xf32>
    %21 = arith.addf %19, %20 : vector<1x32xf32>
    %22 = math.tanh %21 : vector<1x32xf32>
    %c0_9 = arith.constant 0 : index
    %c0_10 = arith.constant 0 : index
    %23 = vector.load %arg3[%c0_9, %c0_10] : memref<8x32xf32, #tpu.memory_space<vmem>>, vector<1x32xf32>
    tpu.vector_store %arg3[%c0_9, %c0_10], %22 {strides = array<i32>} : memref<8x32xf32, #tpu.memory_space<vmem>>, vector<1x32xf32>,
    %24 = vector.extract_strided_slice %17 {offsets = [1, 0], sizes = [1, 32], strides = [1, 1]} : vector<8x32xf32> to vector<1x32xf32>
    %cst_11 = arith.constant dense<0.000000e+00> : vector<1x32xf32>
    %25 = tpu.matmul %22, %1, %cst_11 {dimension_numbers = #tpu.dot_dimension_numbers<[1], [0], [0], [1], [0, 0, 1, 1], [], []>} : vector<1x32xf32>, vector<32x32xf32>, vector<1x32xf32> -> vector<1x32xf32>
    %26 = arith.addf %24, %25 : vector<1x32xf32>
    %27 = math.tanh %26 : vector<1x32xf32>
    %c1 = arith.constant 1 : index
    %c0_12 = arith.constant 0 : index
    %28 = vector.load %arg3[%c1, %c0_12] : memref<8x32xf32, #tpu.memory_space<vmem>>, vector<1x32xf32>
    tpu.vector_store %arg3[%c1, %c0_12], %27 {strides = array<i32>} : memref<8x32xf32, #tpu.memory_space<vmem>>, vector<1x32xf32>,
    %29 = vector.extract_strided_slice %17 {offsets = [2, 0], sizes = [1, 32], strides = [1, 1]} : vector<8x32xf32> to vector<1x32xf32>
    %cst_13 = arith.constant dense<0.000000e+00> : vector<1x32xf32>
    %30 = tpu.matmul %27, %1, %cst_13 {dimension_numbers = #tpu.dot_dimension_numbers<[1], [0], [0], [1], [0, 0, 1, 1], [], []>} : vector<1x32xf32>, vector<32x32xf32>, vector<1x32xf32> -> vector<1x32xf32>
    %31 = arith.addf %29, %30 : vector<1x32xf32>
    %32 = math.tanh %31 : vector<1x32xf32>
    %c2 = arith.constant 2 : index
    %c0_14 = arith.constant 0 : index
    %33 = vector.load %arg3[%c2, %c0_14] : memref<8x32xf32, #tpu.memory_space<vmem>>, vector<1x32xf32>
    tpu.vector_store %arg3[%c2, %c0_14], %32 {strides = array<i32>} : memref<8x32xf32, #tpu.memory_space<vmem>>, vector<1x32xf32>,
    %34 = vector.extract_strided_slice %17 {offsets = [3, 0], sizes = [1, 32], strides = [1, 1]} : vector<8x32xf32> to vector<1x32xf32>
    %cst_15 = arith.constant dense<0.000000e+00> : vector<1x32xf32>
    %35 = tpu.matmul %32, %1, %cst_15 {dimension_numbers = #tpu.dot_dimension_numbers<[1], [0], [0], [1], [0, 0, 1, 1], [], []>} : vector<1x32xf32>, vector<32x32xf32>, vector<1x32xf32> -> vector<1x32xf32>
    %36 = arith.addf %34, %35 : vector<1x32xf32>
    %37 = math.tanh %36 : vector<1x32xf32>
    %c3 = arith.constant 3 : index
    %c0_16 = arith.constant 0 : index
    %38 = vector.load %arg3[%c3, %c0_16] : memref<8x32xf32, #tpu.memory_space<vmem>>, vector<1x32xf32>
    tpu.vector_store %arg3[%c3, %c0_16], %37 {strides = array<i32>} : memref<8x32xf32, #tpu.memory_space<vmem>>, vector<1x32xf32>,
    %39 = vector.extract_strided_slice %17 {offsets = [4, 0], sizes = [1, 32], strides = [1, 1]} : vector<8x32xf32> to vector<1x32xf32>
    %cst_17 = arith.constant dense<0.000000e+00> : vector<1x32xf32>
    %40 = tpu.matmul %37, %1, %cst_17 {dimension_numbers = #tpu.dot_dimension_numbers<[1], [0], [0], [1], [0, 0, 1, 1], [], []>} : vector<1x32xf32>, vector<32x32xf32>, vector<1x32xf32> -> vector<1x32xf32>
    %41 = arith.addf %39, %40 : vector<1x32xf32>
    %42 = math.tanh %41 : vector<1x32xf32>
    %c4 = arith.constant 4 : index
    %c0_18 = arith.constant 0 : index
    %43 = vector.load %arg3[%c4, %c0_18] : memref<8x32xf32, #tpu.memory_space<vmem>>, vector<1x32xf32>
    tpu.vector_store %arg3[%c4, %c0_18], %42 {strides = array<i32>} : memref<8x32xf32, #tpu.memory_space<vmem>>, vector<1x32xf32>,
    %44 = vector.extract_strided_slice %17 {offsets = [5, 0], sizes = [1, 32], strides = [1, 1]} : vector<8x32xf32> to vector<1x32xf32>
    %cst_19 = arith.constant dense<0.000000e+00> : vector<1x32xf32>
    %45 = tpu.matmul %42, %1, %cst_19 {dimension_numbers = #tpu.dot_dimension_numbers<[1], [0], [0], [1], [0, 0, 1, 1], [], []>} : vector<1x32xf32>, vector<32x32xf32>, vector<1x32xf32> -> vector<1x32xf32>
    %46 = arith.addf %44, %45 : vector<1x32xf32>
    %47 = math.tanh %46 : vector<1x32xf32>
    %c5 = arith.constant 5 : index
    %c0_20 = arith.constant 0 : index
    %48 = vector.load %arg3[%c5, %c0_20] : memref<8x32xf32, #tpu.memory_space<vmem>>, vector<1x32xf32>
    tpu.vector_store %arg3[%c5, %c0_20], %47 {strides = array<i32>} : memref<8x32xf32, #tpu.memory_space<vmem>>, vector<1x32xf32>,
    %49 = vector.extract_strided_slice %17 {offsets = [6, 0], sizes = [1, 32], strides = [1, 1]} : vector<8x32xf32> to vector<1x32xf32>
    %cst_21 = arith.constant dense<0.000000e+00> : vector<1x32xf32>
    %50 = tpu.matmul %47, %1, %cst_21 {dimension_numbers = #tpu.dot_dimension_numbers<[1], [0], [0], [1], [0, 0, 1, 1], [], []>} : vector<1x32xf32>, vector<32x32xf32>, vector<1x32xf32> -> vector<1x32xf32>
    %51 = arith.addf %49, %50 : vector<1x32xf32>
    %52 = math.tanh %51 : vector<1x32xf32>
    %c6 = arith.constant 6 : index
    %c0_22 = arith.constant 0 : index
    %53 = vector.load %arg3[%c6, %c0_22] : memref<8x32xf32, #tpu.memory_space<vmem>>, vector<1x32xf32>
    tpu.vector_store %arg3[%c6, %c0_22], %52 {strides = array<i32>} : memref<8x32xf32, #tpu.memory_space<vmem>>, vector<1x32xf32>,
    %54 = vector.extract_strided_slice %17 {offsets = [7, 0], sizes = [1, 32], strides = [1, 1]} : vector<8x32xf32> to vector<1x32xf32>
    %cst_23 = arith.constant dense<0.000000e+00> : vector<1x32xf32>
    %55 = tpu.matmul %52, %1, %cst_23 {dimension_numbers = #tpu.dot_dimension_numbers<[1], [0], [0], [1], [0, 0, 1, 1], [], []>} : vector<1x32xf32>, vector<32x32xf32>, vector<1x32xf32> -> vector<1x32xf32>
    %56 = arith.addf %54, %55 : vector<1x32xf32>
    %57 = math.tanh %56 : vector<1x32xf32>
    %c7 = arith.constant 7 : index
    %c0_24 = arith.constant 0 : index
    %58 = vector.load %arg3[%c7, %c0_24] : memref<8x32xf32, #tpu.memory_space<vmem>>, vector<1x32xf32>
    tpu.vector_store %arg3[%c7, %c0_24], %57 {strides = array<i32>} : memref<8x32xf32, #tpu.memory_space<vmem>>, vector<1x32xf32>,
    %c0_25 = arith.constant 0 : index
    %c0_26 = arith.constant 0 : index
    %59 = vector.load %arg3[%c0_25, %c0_26] : memref<8x32xf32, #tpu.memory_space<vmem>>, vector<8x32xf32>
    %cst_27 = arith.constant dense<0.000000e+00> : vector<8x128xf32>
    %60 = tpu.matmul %59, %2, %cst_27 {dimension_numbers = #tpu.dot_dimension_numbers<[1], [0], [0], [1], [0, 0, 1, 1], [], []>} : vector<8x32xf32>, vector<32x128xf32>, vector<8x128xf32> -> vector<8x128xf32>
    %61 = vector.broadcast %4 : vector<1x128xf32> to vector<8x128xf32>
    %62 = arith.addf %60, %61 : vector<8x128xf32>
    %cst_28 = arith.constant dense<0xFF800000> : vector<8xf32>
    %63 = vector.multi_reduction <maximumf>, %62, %cst_28 [1] : vector<8x128xf32> to vector<8xf32>
    %64 = vector.shape_cast %63 : vector<8xf32> to vector<8x1xf32>
    %65 = vector.broadcast %64 : vector<8x1xf32> to vector<8x128xf32>
    %66 = arith.subf %62, %65 : vector<8x128xf32>
    %67 = math.exp %66 : vector<8x128xf32>
    %cst_29 = arith.constant dense<0.000000e+00> : vector<8xf32>
    %68 = vector.multi_reduction <add>, %67, %cst_29 [1] : vector<8x128xf32> to vector<8xf32>
    %69 = vector.shape_cast %68 : vector<8xf32> to vector<8x1xf32>
    %70 = math.log %69 : vector<8x1xf32>
    %71 = arith.addf %64, %70 : vector<8x1xf32>
    %72 = vector.broadcast %71 : vector<8x1xf32> to vector<8x128xf32>
    %73 = arith.subf %62, %72 : vector<8x128xf32>
    %cst_30 = arith.constant 0.000000e+00 : f32
    %74 = vector.broadcast %cst_30 : f32 to vector<1x96xf32>
    %75 = tpu.concatenate %57, %74 in 1 : vector<1x32xf32>, vector<1x96xf32> -> vector<1x128xf32>
    %cst_31 = arith.constant 0.000000e+00 : f32
    %76 = vector.broadcast %cst_31 : f32 to vector<7x128xf32>
    %77 = tpu.concatenate %75, %76 in 0 : vector<1x128xf32>, vector<7x128xf32> -> vector<8x128xf32>
    %78 = tpu.concatenate %73, %77 in 0 : vector<8x128xf32>, vector<8x128xf32> -> vector<16x128xf32>
    %c0_32 = arith.constant 0 : index
    %c0_33 = arith.constant 0 : index
    %79 = vector.load %arg2[%c0_32, %c0_33] : memref<16x128xf32, #tpu.memory_space<vmem>>, vector<16x128xf32>
    tpu.vector_store %arg2[%c0_32, %c0_33], %78 {strides = array<i32>} : memref<16x128xf32, #tpu.memory_space<vmem>>, vector<16x128xf32>,
    return
  }
}

</mosaic_0001>

<llo_original>
// kernel: _run_stateless.1
$region0: #{_run_stateless.1}
  #allocation0 [shape = 'u32[]', space=smem, size = 0x4, offset = 0x4, fixed_abs, tag = 'smem constant byte address 0x4 - core index']
  #allocation1 [shape = 'u32[144,128]{1,0:T(1,128)}', space=vmem, size = 0x12000, scoped, tag = 'internal scratch']
  #allocation2 [shape = 'f32[8,32]{1,0:T(8,128)}', space=vmem, size = 0x1000, scoped, tag = 'scratch operand']
  %s0 = inlined_call_operand.vmem [shape: s32[8,1], index: 0, kind: input, shape index: {}]
  %s1 = inlined_call_operand.hbm [shape: f32[104,128], index: 1, kind: input, shape index: {}]
  %s2 = inlined_call_operand.vmem [shape: f32[16,128], index: 2, kind: output, shape index: {}]
  %s3 = sld [smem:[#allocation0]]
  $region22: #{_run_stateless.1} parent=0
    _
  %s5 = ssub.s32 1, %s3
  %s6 = scalar_select 0, %s5, %s3
  $region1: #{_run_stateless.1} parent=0
    #allocation3 [shape = 'u8[53248]{0}', space=vmem, size = 0xd000, scoped, tag = 'input window, operand 1, single buffered']
    #allocation4 [shape = 's32[1]{0}', space=sflag, size = 0x4, scoped, tag = 'scoped memory for _run_stateless.1']
    %7 = vsyncpa [#allocation4], 0
    // Predicated region
    $region2: #{_run_stateless.1} parent=1 // pred_check
      _
    $region3: #{_run_stateless.1} parent=1 // pred_check_branch
      %9 = sbr.rel (0) target = $region5
    $region4: #{_run_stateless.1} parent=1 // pred_region
      _
    $region5: #{_run_stateless.1} parent=1 // pred_fallthru
      _
    // Predicated region
    $region6: #{_run_stateless.1} parent=1 // pred_check
      _
    $region7: #{_run_stateless.1} parent=1 // pred_check_branch
      %11 = sbr.rel (0) target = $region9
    $region8: #{_run_stateless.1} parent=1 // pred_region
      %s13 = ssub.s32 1664, 1664
      %14 = vsyncadd [#allocation4], %s13
      %s15 = sshll.u32 [#allocation3], 4
      %s16 = int_to_ptr.vmem [resolvable:$true] %s15
      %21 = dma.hbm_to_vmem [thread:$0]  %s1, 1664, %s16, [#allocation4], 128, 128, 8
    $region9: #{_run_stateless.1} parent=1 // pred_fallthru
      _
    // Predicated region
    $region10: #{_run_stateless.1} parent=1 // pred_check
      _
    $region11: #{_run_stateless.1} parent=1 // pred_check_branch
      %23 = sbr.rel (0) target = $region13
    $region12: #{_run_stateless.1} parent=1 // pred_region
      %24 = dma.done [#allocation4], 1664
    $region13: #{_run_stateless.1} parent=1 // pred_fallthru
      _
    %v25 = vld [vmem:[#allocation3] sm:$0xff]
    %v26 = vld [vmem:[#allocation3 + $0x8] sm:$0xff]
    %v27 = vld [vmem:[#allocation3 + $0x10] sm:$0xff]
    %v28 = vld [vmem:[#allocation3 + $0x18] sm:$0xff]
    %v29 = vld [vmem:[#allocation3 + $0x20] sm:$0xff]
    %v30 = vld [vmem:[#allocation3 + $0x28] sm:$0xff]
    %v31 = vld [vmem:[#allocation3 + $0x30] sm:$0xff]
    %v32 = vld [vmem:[#allocation3 + $0x38] sm:$0xff]
    %v33 = vld [vmem:[#allocation3 + $0x40] sm:$0xff]
    %v34 = vld [vmem:[#allocation3 + $0x48] sm:$0xff]
    %v35 = vld [vmem:[#allocation3 + $0x50] sm:$0xff]
    %v36 = vld [vmem:[#allocation3 + $0x58] sm:$0xff]
    %v37 = vld [vmem:[#allocation3 + $0x60] sm:$0x1]
    %v38 = vld [vmem:[#allocation3 + $0x61] sm:$0x1]
    %v39 = vld [vmem:[%s0] sm:$0xff]
    %vm40 = vcmp.gt.s32.totalorder %v39, 0
    %v41 = vsel %vm40, %v39, 0
    %vm42 = vcmp.lt.s32.totalorder %v41, 31
    %v43 = vsel %vm42, %v41, 31
    %v44 = vlaneseq
    %v45 = vand.u32 %v44, 127
    %46 = vset.pattern.permute.xlu0 0
    %47 = vperm.xlu0 %46, %v43
    %v48 = vpop.permute.xlu0 %47
    %vm49 = vcmp.eq.s32.totalorder %v45, %v48
    %v50 = vsel %vm49, 1, 0
    %v51 = vcvt.s32.f32 %v50
    %v52 = vlaneseq
    %v53 = vshrl.u32 %v52, 7
    %v54 = vsub.s32 0, %v53
    %v55 = vrot.slane %v37, %v54
    %vm56 = vcmask 261120
    %v58 = vsel %vm56, %v51, 0
    %60 = vmatprep.subr.mxu0 0.0
    %61 = vmatpush1.msra.mxu0 0.0
    %62 = vmatprep.subr.mxu0 0.0
    %63 = vmatpush1.msra.mxu0 0.0
    %64 = vmatprep.subr.mxu0 0.0
    %65 = vmatpush1.msra.mxu0 0.0
    %66 = vmatprep.subr.mxu0 0.0
    %67 = vmatpush1.msra.mxu0 0.0
    %68 = vmatprep.subr.mxu0 0.0
    %69 = vmatpush1.msra.mxu0 0.0
    %70 = vmatprep.subr.mxu0 0.0
    %71 = vmatpush1.msra.mxu0 0.0
    %72 = vmatprep.subr.mxu0 0.0
    %73 = vmatpush1.msra.mxu0 0.0
    %74 = vmatprep.subr.mxu0 0.0
    %75 = vmatpush1.msra.mxu0 0.0
    %76 = vmatprep.subr.mxu0 0.0
    %77 = vmatpush1.msra.mxu0 0.0
    %78 = vmatprep.subr.mxu0 0.0
    %79 = vmatpush1.msra.mxu0 0.0
    %80 = vmatprep.subr.mxu0 0.0
    %81 = vmatpush1.msra.mxu0 0.0
    %82 = vmatprep.subr.mxu0 0.0
    %83 = vmatpush1.msra.mxu0 0.0
    %84 = vmatprep.subr.mxu0 0.0
    %85 = vmatpush1.msra.mxu0 %v28
    %86 = vmatprep.subr.mxu0 0.0
    %87 = vmatpush1.msra.mxu0 %v27
    %88 = vmatprep.subr.mxu0 0.0
    %89 = vmatpush1.msra.mxu0 %v26
    %90 = vmatprep.subr.mxu0 0.0
    %91 = vmatpush1.msra.mxu0 %v25
    %92 = vmatprep.subr.mxu0 0.0
    %93 = vmatpush2.msra.mxu0 0.0
    %94 = vmatprep.subr.mxu0 0.0
    %95 = vmatpush2.msra.mxu0 0.0
    %96 = vmatprep.subr.mxu0 0.0
    %97 = vmatpush2.msra.mxu0 0.0
    %98 = vmatprep.subr.mxu0 0.0
    %99 = vmatpush2.msra.mxu0 0.0
    %100 = vmatprep.subr.mxu0 0.0
    %101 = vmatpush2.msra.mxu0 0.0
    %102 = vmatprep.subr.mxu0 0.0
    %103 = vmatpush2.msra.mxu0 0.0
    %104 = vmatprep.subr.mxu0 0.0
    %105 = vmatpush2.msra.mxu0 0.0
    %106 = vmatprep.subr.mxu0 0.0
    %107 = vmatpush2.msra.mxu0 0.0
    %108 = vmatprep.subr.mxu0 0.0
    %109 = vmatpush2.msra.mxu0 0.0
    %110 = vmatprep.subr.mxu0 0.0
    %111 = vmatpush2.msra.mxu0 0.0
    %112 = vmatprep.subr.mxu0 0.0
    %113 = vmatpush2.msra.mxu0 0.0
    %114 = vmatprep.subr.mxu0 0.0
    %115 = vmatpush2.msra.mxu0 0.0
    %116 = vmatprep.subr.mxu0 0.0
    %117 = vmatpush2.msra.mxu0 0.0
    %118 = vmatprep.subr.mxu0 0.0
    %119 = vmatpush2.msra.mxu0 0.0
    %120 = vmatprep.subr.mxu0 0.0
    %121 = vmatpush2.msra.mxu0 0.0
    %122 = vmatprep.subr.mxu0 0.0
    %123 = vmatpush2.msra.mxu0 0.0
    %124 = vmatprep.mubr.f32.mxu0 0.0
    %125 = vmatmul.mubr.f32.gmra.mxu0 %v58
    %v126 = vpop.f32.mrf.mxu0
    %v127 = vadd.f32 %v55, %v126
    %v128 = vpop.f32.mrf.mxu0
    %129 = vdwg.mxu0
    %v131 = vsel %vm56, 0.0, 0
    %133 = vmatprep.subr.mxu0 0.0
    %134 = vmatpush1.msra.mxu0 0.0
    %135 = vmatprep.subr.mxu0 0.0
    %136 = vmatpush1.msra.mxu0 0.0
    %137 = vmatprep.subr.mxu0 0.0
    %138 = vmatpush1.msra.mxu0 0.0
    %139 = vmatprep.subr.mxu0 0.0
    %140 = vmatpush1.msra.mxu0 0.0
    %141 = vmatprep.subr.mxu0 0.0
    %142 = vmatpush1.msra.mxu0 0.0
    %143 = vmatprep.subr.mxu0 0.0
    %144 = vmatpush1.msra.mxu0 0.0
    %145 = vmatprep.subr.mxu0 0.0
    %146 = vmatpush1.msra.mxu0 0.0
    %147 = vmatprep.subr.mxu0 0.0
    %148 = vmatpush1.msra.mxu0 0.0
    %149 = vmatprep.subr.mxu0 0.0
    %150 = vmatpush1.msra.mxu0 0.0
    %151 = vmatprep.subr.mxu0 0.0
    %152 = vmatpush1.msra.mxu0 0.0
    %153 = vmatprep.subr.mxu0 0.0
    %154 = vmatpush1.msra.mxu0 0.0
    %155 = vmatprep.subr.mxu0 0.0
    %156 = vmatpush1.msra.mxu0 0.0
    %157 = vmatprep.subr.mxu0 0.0
    %158 = vmatpush1.msra.mxu0 %v32
    %159 = vmatprep.subr.mxu0 0.0
    %160 = vmatpush1.msra.mxu0 %v31
    %161 = vmatprep.subr.mxu0 0.0
    %162 = vmatpush1.msra.mxu0 %v30
    %163 = vmatprep.subr.mxu0 0.0
    %164 = vmatpush1.msra.mxu0 %v29
    %165 = vmatprep.subr.mxu0 0.0
    %166 = vmatpush2.msra.mxu0 0.0
    %167 = vmatprep.subr.mxu0 0.0
    %168 = vmatpush2.msra.mxu0 0.0
    %169 = vmatprep.subr.mxu0 0.0
    %170 = vmatpush2.msra.mxu0 0.0
    %171 = vmatprep.subr.mxu0 0.0
    %172 = vmatpush2.msra.mxu0 0.0
    %173 = vmatprep.subr.mxu0 0.0
    %174 = vmatpush2.msra.mxu0 0.0
    %175 = vmatprep.subr.mxu0 0.0
    %176 = vmatpush2.msra.mxu0 0.0
    %177 = vmatprep.subr.mxu0 0.0
    %178 = vmatpush2.msra.mxu0 0.0
    %179 = vmatprep.subr.mxu0 0.0
    %180 = vmatpush2.msra.mxu0 0.0
    %181 = vmatprep.subr.mxu0 0.0
    %182 = vmatpush2.msra.mxu0 0.0
    %183 = vmatprep.subr.mxu0 0.0
    %184 = vmatpush2.msra.mxu0 0.0
    %185 = vmatprep.subr.mxu0 0.0
    %186 = vmatpush2.msra.mxu0 0.0
    %187 = vmatprep.subr.mxu0 0.0
    %188 = vmatpush2.msra.mxu0 0.0
    %189 = vmatprep.subr.mxu0 0.0
    %190 = vmatpush2.msra.mxu0 0.0
    %191 = vmatprep.subr.mxu0 0.0
    %192 = vmatpush2.msra.mxu0 0.0
    %193 = vmatprep.subr.mxu0 0.0
    %194 = vmatpush2.msra.mxu0 0.0
    %195 = vmatprep.subr.mxu0 0.0
    %196 = vmatpush2.msra.mxu0 0.0
    %197 = vmatprep.mubr.f32.mxu0 0.0
    %198 = vmatmul.mubr.f32.gmra.mxu0 %v131
    %v199 = vpop.f32.mrf.mxu0
    %v200 = vadd.f32 0.0, %v199
    %v201 = vpop.f32.mrf.mxu0
    %202 = vdwg.mxu0
    %v203 = vadd.f32 %v127, %v200
    %v204 = vtanh.pop %v203
    %vm205 = vcmask 253952
    %206 = vst.msk [vmem:[#allocation2] sm:$0x1] %vm205, %v204
    %v208 = vsel %vm56, %v204, 0
    %210 = vmatprep.subr.mxu0 0.0
    %211 = vmatpush1.msra.mxu0 0.0
    %212 = vmatprep.subr.mxu0 0.0
    %213 = vmatpush1.msra.mxu0 0.0
    %214 = vmatprep.subr.mxu0 0.0
    %215 = vmatpush1.msra.mxu0 0.0
    %216 = vmatprep.subr.mxu0 0.0
    %217 = vmatpush1.msra.mxu0 0.0
    %218 = vmatprep.subr.mxu0 0.0
    %219 = vmatpush1.msra.mxu0 0.0
    %220 = vmatprep.subr.mxu0 0.0
    %221 = vmatpush1.msra.mxu0 0.0
    %222 = vmatprep.subr.mxu0 0.0
    %223 = vmatpush1.msra.mxu0 0.0
    %224 = vmatprep.subr.mxu0 0.0
    %225 = vmatpush1.msra.mxu0 0.0
    %226 = vmatprep.subr.mxu0 0.0
    %227 = vmatpush1.msra.mxu0 0.0
    %228 = vmatprep.subr.mxu0 0.0
    %229 = vmatpush1.msra.mxu0 0.0
    %230 = vmatprep.subr.mxu0 0.0
    %231 = vmatpush1.msra.mxu0 0.0
    %232 = vmatprep.subr.mxu0 0.0
    %233 = vmatpush1.msra.mxu0 0.0
    %234 = vmatprep.subr.mxu0 0.0
    %235 = vmatpush1.msra.mxu0 %v32
    %236 = vmatprep.subr.mxu0 0.0
    %237 = vmatpush1.msra.mxu0 %v31
    %238 = vmatprep.subr.mxu0 0.0
    %239 = vmatpush1.msra.mxu0 %v30
    %240 = vmatprep.subr.mxu0 0.0
    %241 = vmatpush1.msra.mxu0 %v29
    %242 = vmatprep.subr.mxu0 0.0
    %243 = vmatpush2.msra.mxu0 0.0
    %244 = vmatprep.subr.mxu0 0.0
    %245 = vmatpush2.msra.mxu0 0.0
    %246 = vmatprep.subr.mxu0 0.0
    %247 = vmatpush2.msra.mxu0 0.0
    %248 = vmatprep.subr.mxu0 0.0
    %249 = vmatpush2.msra.mxu0 0.0
    %250 = vmatprep.subr.mxu0 0.0
    %251 = vmatpush2.msra.mxu0 0.0
    %252 = vmatprep.subr.mxu0 0.0
    %253 = vmatpush2.msra.mxu0 0.0
    %254 = vmatprep.subr.mxu0 0.0
    %255 = vmatpush2.msra.mxu0 0.0
    %256 = vmatprep.subr.mxu0 0.0
    %257 = vmatpush2.msra.mxu0 0.0
    %258 = vmatprep.subr.mxu0 0.0
    %259 = vmatpush2.msra.mxu0 0.0
    %260 = vmatprep.subr.mxu0 0.0
    %261 = vmatpush2.msra.mxu0 0.0
    %262 = vmatprep.subr.mxu0 0.0
    %263 = vmatpush2.msra.mxu0 0.0
    %264 = vmatprep.subr.mxu0 0.0
    %265 = vmatpush2.msra.mxu0 0.0
    %266 = vmatprep.subr.mxu0 0.0
    %267 = vmatpush2.msra.mxu0 0.0
    %268 = vmatprep.subr.mxu0 0.0
    %269 = vmatpush2.msra.mxu0 0.0
    %270 = vmatprep.subr.mxu0 0.0
    %271 = vmatpush2.msra.mxu0 0.0
    %272 = vmatprep.subr.mxu0 0.0
    %273 = vmatpush2.msra.mxu0 0.0
    %274 = vmatprep.mubr.f32.mxu0 0.0
    %275 = vmatmul.mubr.f32.gmra.mxu0 %v208
    %v276 = vpop.f32.mrf.mxu0
    %v277 = vadd.f32 0.0, %v276
    %v278 = vpop.f32.mrf.mxu0
    %279 = vdwg.mxu0
    %v281 = vrot.slane %v277, 7
    %v283 = vadd.f32 %v127, %v281
    %v284 = vtanh.pop %v283
    %vm285 = vcmask 254977
    %286 = vst.msk [vmem:[#allocation2] sm:$0x2] %vm285, %v284
    %v288 = vrot.slane %v284, 1
    %v289 = vsel %vm56, %v288, 0
    %291 = vmatprep.subr.mxu0 0.0
    %292 = vmatpush1.msra.mxu0 0.0
    %293 = vmatprep.subr.mxu0 0.0
    %294 = vmatpush1.msra.mxu0 0.0
    %295 = vmatprep.subr.mxu0 0.0
    %296 = vmatpush1.msra.mxu0 0.0
    %297 = vmatprep.subr.mxu0 0.0
    %298 = vmatpush1.msra.mxu0 0.0
    %299 = vmatprep.subr.mxu0 0.0
    %300 = vmatpush1.msra.mxu0 0.0
    %301 = vmatprep.subr.mxu0 0.0
    %302 = vmatpush1.msra.mxu0 0.0
    %303 = vmatprep.subr.mxu0 0.0
    %304 = vmatpush1.msra.mxu0 0.0
    %305 = vmatprep.subr.mxu0 0.0
    %306 = vmatpush1.msra.mxu0 0.0
    %307 = vmatprep.subr.mxu0 0.0
    %308 = vmatpush1.msra.mxu0 0.0
    %309 = vmatprep.subr.mxu0 0.0
    %310 = vmatpush1.msra.mxu0 0.0
    %311 = vmatprep.subr.mxu0 0.0
    %312 = vmatpush1.msra.mxu0 0.0
    %313 = vmatprep.subr.mxu0 0.0
    %314 = vmatpush1.msra.mxu0 0.0
    %315 = vmatprep.subr.mxu0 0.0
    %316 = vmatpush1.msra.mxu0 %v32
    %317 = vmatprep.subr.mxu0 0.0
    %318 = vmatpush1.msra.mxu0 %v31
    %319 = vmatprep.subr.mxu0 0.0
    %320 = vmatpush1.msra.mxu0 %v30
    %321 = vmatprep.subr.mxu0 0.0
    %322 = vmatpush1.msra.mxu0 %v29
    %323 = vmatprep.subr.mxu0 0.0
    %324 = vmatpush2.msra.mxu0 0.0
    %325 = vmatprep.subr.mxu0 0.0
    %326 = vmatpush2.msra.mxu0 0.0
    %327 = vmatprep.subr.mxu0 0.0
    %328 = vmatpush2.msra.mxu0 0.0
    %329 = vmatprep.subr.mxu0 0.0
    %330 = vmatpush2.msra.mxu0 0.0
    %331 = vmatprep.subr.mxu0 0.0
    %332 = vmatpush2.msra.mxu0 0.0
    %333 = vmatprep.subr.mxu0 0.0
    %334 = vmatpush2.msra.mxu0 0.0
    %335 = vmatprep.subr.mxu0 0.0
    %336 = vmatpush2.msra.mxu0 0.0
    %337 = vmatprep.subr.mxu0 0.0
    %338 = vmatpush2.msra.mxu0 0.0
    %339 = vmatprep.subr.mxu0 0.0
    %340 = vmatpush2.msra.mxu0 0.0
    %341 = vmatprep.subr.mxu0 0.0
    %342 = vmatpush2.msra.mxu0 0.0
    %343 = vmatprep.subr.mxu0 0.0
    %344 = vmatpush2.msra.mxu0 0.0
    %345 = vmatprep.subr.mxu0 0.0
    %346 = vmatpush2.msra.mxu0 0.0
    %347 = vmatprep.subr.mxu0 0.0
    %348 = vmatpush2.msra.mxu0 0.0
    %349 = vmatprep.subr.mxu0 0.0
    %350 = vmatpush2.msra.mxu0 0.0
    %351 = vmatprep.subr.mxu0 0.0
    %352 = vmatpush2.msra.mxu0 0.0
    %353 = vmatprep.subr.mxu0 0.0
    %354 = vmatpush2.msra.mxu0 0.0
    %355 = vmatprep.mubr.f32.mxu0 0.0
    %356 = vmatmul.mubr.f32.gmra.mxu0 %v289
    %v357 = vpop.f32.mrf.mxu0
    %v358 = vadd.f32 0.0, %v357
    %v359 = vpop.f32.mrf.mxu0
    %360 = vdwg.mxu0
    %v362 = vrot.slane %v358, 6
    %v364 = vadd.f32 %v127, %v362
    %v365 = vtanh.pop %v364
    %vm366 = vcmask 256002
    %367 = vst.msk [vmem:[#allocation2] sm:$0x4] %vm366, %v365
    %v369 = vrot.slane %v365, 2
    %v370 = vsel %vm56, %v369, 0
    %372 = vmatprep.subr.mxu0 0.0
    %373 = vmatpush1.msra.mxu0 0.0
    %374 = vmatprep.subr.mxu0 0.0
    %375 = vmatpush1.msra.mxu0 0.0
    %376 = vmatprep.subr.mxu0 0.0
    %377 = vmatpush1.msra.mxu0 0.0
    %378 = vmatprep.subr.mxu0 0.0
    %379 = vmatpush1.msra.mxu0 0.0
    %380 = vmatprep.subr.mxu0 0.0
    %381 = vmatpush1.msra.mxu0 0.0
    %382 = vmatprep.subr.mxu0 0.0
    %383 = vmatpush1.msra.mxu0 0.0
    %384 = vmatprep.subr.mxu0 0.0
    %385 = vmatpush1.msra.mxu0 0.0
    %386 = vmatprep.subr.mxu0 0.0
    %387 = vmatpush1.msra.mxu0 0.0
    %388 = vmatprep.subr.mxu0 0.0
    %389 = vmatpush1.msra.mxu0 0.0
    %390 = vmatprep.subr.mxu0 0.0
    %391 = vmatpush1.msra.mxu0 0.0
    %392 = vmatprep.subr.mxu0 0.0
    %393 = vmatpush1.msra.mxu0 0.0
    %394 = vmatprep.subr.mxu0 0.0
    %395 = vmatpush1.msra.mxu0 0.0
    %396 = vmatprep.subr.mxu0 0.0
    %397 = vmatpush1.msra.mxu0 %v32
    %398 = vmatprep.subr.mxu0 0.0
    %399 = vmatpush1.msra.mxu0 %v31
    %400 = vmatprep.subr.mxu0 0.0
    %401 = vmatpush1.msra.mxu0 %v30
    %402 = vmatprep.subr.mxu0 0.0
    %403 = vmatpush1.msra.mxu0 %v29
    %404 = vmatprep.subr.mxu0 0.0
    %405 = vmatpush2.msra.mxu0 0.0
    %406 = vmatprep.subr.mxu0 0.0
    %407 = vmatpush2.msra.mxu0 0.0
    %408 = vmatprep.subr.mxu0 0.0
    %409 = vmatpush2.msra.mxu0 0.0
    %410 = vmatprep.subr.mxu0 0.0
    %411 = vmatpush2.msra.mxu0 0.0
    %412 = vmatprep.subr.mxu0 0.0
    %413 = vmatpush2.msra.mxu0 0.0
    %414 = vmatprep.subr.mxu0 0.0
    %415 = vmatpush2.msra.mxu0 0.0
    %416 = vmatprep.subr.mxu0 0.0
    %417 = vmatpush2.msra.mxu0 0.0
    %418 = vmatprep.subr.mxu0 0.0
    %419 = vmatpush2.msra.mxu0 0.0
    %420 = vmatprep.subr.mxu0 0.0
    %421 = vmatpush2.msra.mxu0 0.0
    %422 = vmatprep.subr.mxu0 0.0
    %423 = vmatpush2.msra.mxu0 0.0
    %424 = vmatprep.subr.mxu0 0.0
    %425 = vmatpush2.msra.mxu0 0.0
    %426 = vmatprep.subr.mxu0 0.0
    %427 = vmatpush2.msra.mxu0 0.0
    %428 = vmatprep.subr.mxu0 0.0
    %429 = vmatpush2.msra.mxu0 0.0
    %430 = vmatprep.subr.mxu0 0.0
    %431 = vmatpush2.msra.mxu0 0.0
    %432 = vmatprep.subr.mxu0 0.0
    %433 = vmatpush2.msra.mxu0 0.0
    %434 = vmatprep.subr.mxu0 0.0
    %435 = vmatpush2.msra.mxu0 0.0
    %436 = vmatprep.mubr.f32.mxu0 0.0
    %437 = vmatmul.mubr.f32.gmra.mxu0 %v370
    %v438 = vpop.f32.mrf.mxu0
    %v439 = vadd.f32 0.0, %v438
    %v440 = vpop.f32.mrf.mxu0
    %441 = vdwg.mxu0
    %v443 = vrot.slane %v439, 5
    %v445 = vadd.f32 %v127, %v443
    %v446 = vtanh.pop %v445
    %vm447 = vcmask 257027
    %448 = vst.msk [vmem:[#allocation2] sm:$0x8] %vm447, %v446
    %v450 = vrot.slane %v446, 3
    %v451 = vsel %vm56, %v450, 0
    %453 = vmatprep.subr.mxu0 0.0
    %454 = vmatpush1.msra.mxu0 0.0
    %455 = vmatprep.subr.mxu0 0.0
    %456 = vmatpush1.msra.mxu0 0.0
    %457 = vmatprep.subr.mxu0 0.0
    %458 = vmatpush1.msra.mxu0 0.0
    %459 = vmatprep.subr.mxu0 0.0
    %460 = vmatpush1.msra.mxu0 0.0
    %461 = vmatprep.subr.mxu0 0.0
    %462 = vmatpush1.msra.mxu0 0.0
    %463 = vmatprep.subr.mxu0 0.0
    %464 = vmatpush1.msra.mxu0 0.0
    %465 = vmatprep.subr.mxu0 0.0
    %466 = vmatpush1.msra.mxu0 0.0
    %467 = vmatprep.subr.mxu0 0.0
    %468 = vmatpush1.msra.mxu0 0.0
    %469 = vmatprep.subr.mxu0 0.0
    %470 = vmatpush1.msra.mxu0 0.0
    %471 = vmatprep.subr.mxu0 0.0
    %472 = vmatpush1.msra.mxu0 0.0
    %473 = vmatprep.subr.mxu0 0.0
    %474 = vmatpush1.msra.mxu0 0.0
    %475 = vmatprep.subr.mxu0 0.0
    %476 = vmatpush1.msra.mxu0 0.0
    %477 = vmatprep.subr.mxu0 0.0
    %478 = vmatpush1.msra.mxu0 %v32
    %479 = vmatprep.subr.mxu0 0.0
    %480 = vmatpush1.msra.mxu0 %v31
    %481 = vmatprep.subr.mxu0 0.0
    %482 = vmatpush1.msra.mxu0 %v30
    %483 = vmatprep.subr.mxu0 0.0
    %484 = vmatpush1.msra.mxu0 %v29
    %485 = vmatprep.subr.mxu0 0.0
    %486 = vmatpush2.msra.mxu0 0.0
    %487 = vmatprep.subr.mxu0 0.0
    %488 = vmatpush2.msra.mxu0 0.0
    %489 = vmatprep.subr.mxu0 0.0
    %490 = vmatpush2.msra.mxu0 0.0
    %491 = vmatprep.subr.mxu0 0.0
    %492 = vmatpush2.msra.mxu0 0.0
    %493 = vmatprep.subr.mxu0 0.0
    %494 = vmatpush2.msra.mxu0 0.0
    %495 = vmatprep.subr.mxu0 0.0
    %496 = vmatpush2.msra.mxu0 0.0
    %497 = vmatprep.subr.mxu0 0.0
    %498 = vmatpush2.msra.mxu0 0.0
    %499 = vmatprep.subr.mxu0 0.0
    %500 = vmatpush2.msra.mxu0 0.0
    %501 = vmatprep.subr.mxu0 0.0
    %502 = vmatpush2.msra.mxu0 0.0
    %503 = vmatprep.subr.mxu0 0.0
    %504 = vmatpush2.msra.mxu0 0.0
    %505 = vmatprep.subr.mxu0 0.0
    %506 = vmatpush2.msra.mxu0 0.0
    %507 = vmatprep.subr.mxu0 0.0
    %508 = vmatpush2.msra.mxu0 0.0
    %509 = vmatprep.subr.mxu0 0.0
    %510 = vmatpush2.msra.mxu0 0.0
    %511 = vmatprep.subr.mxu0 0.0
    %512 = vmatpush2.msra.mxu0 0.0
    %513 = vmatprep.subr.mxu0 0.0
    %514 = vmatpush2.msra.mxu0 0.0
    %515 = vmatprep.subr.mxu0 0.0
    %516 = vmatpush2.msra.mxu0 0.0
    %517 = vmatprep.mubr.f32.mxu0 0.0
    %518 = vmatmul.mubr.f32.gmra.mxu0 %v451
    %v519 = vpop.f32.mrf.mxu0
    %v520 = vadd.f32 0.0, %v519
    %v521 = vpop.f32.mrf.mxu0
    %522 = vdwg.mxu0
    %v524 = vrot.slane %v520, 4
    %v526 = vadd.f32 %v127, %v524
    %v527 = vtanh.pop %v526
    %vm528 = vcmask 258052
    %529 = vst.msk [vmem:[#allocation2] sm:$0x10] %vm528, %v527
    %v531 = vrot.slane %v527, 4
    %v532 = vsel %vm56, %v531, 0
    %534 = vmatprep.subr.mxu0 0.0
    %535 = vmatpush1.msra.mxu0 0.0
    %536 = vmatprep.subr.mxu0 0.0
    %537 = vmatpush1.msra.mxu0 0.0
    %538 = vmatprep.subr.mxu0 0.0
    %539 = vmatpush1.msra.mxu0 0.0
    %540 = vmatprep.subr.mxu0 0.0
    %541 = vmatpush1.msra.mxu0 0.0
    %542 = vmatprep.subr.mxu0 0.0
    %543 = vmatpush1.msra.mxu0 0.0
    %544 = vmatprep.subr.mxu0 0.0
    %545 = vmatpush1.msra.mxu0 0.0
    %546 = vmatprep.subr.mxu0 0.0
    %547 = vmatpush1.msra.mxu0 0.0
    %548 = vmatprep.subr.mxu0 0.0
    %549 = vmatpush1.msra.mxu0 0.0
    %550 = vmatprep.subr.mxu0 0.0
    %551 = vmatpush1.msra.mxu0 0.0
    %552 = vmatprep.subr.mxu0 0.0
    %553 = vmatpush1.msra.mxu0 0.0
    %554 = vmatprep.subr.mxu0 0.0
    %555 = vmatpush1.msra.mxu0 0.0
    %556 = vmatprep.subr.mxu0 0.0
    %557 = vmatpush1.msra.mxu0 0.0
    %558 = vmatprep.subr.mxu0 0.0
    %559 = vmatpush1.msra.mxu0 %v32
    %560 = vmatprep.subr.mxu0 0.0
    %561 = vmatpush1.msra.mxu0 %v31
    %562 = vmatprep.subr.mxu0 0.0
    %563 = vmatpush1.msra.mxu0 %v30
    %564 = vmatprep.subr.mxu0 0.0
    %565 = vmatpush1.msra.mxu0 %v29
    %566 = vmatprep.subr.mxu0 0.0
    %567 = vmatpush2.msra.mxu0 0.0
    %568 = vmatprep.subr.mxu0 0.0
    %569 = vmatpush2.msra.mxu0 0.0
    %570 = vmatprep.subr.mxu0 0.0
    %571 = vmatpush2.msra.mxu0 0.0
    %572 = vmatprep.subr.mxu0 0.0
    %573 = vmatpush2.msra.mxu0 0.0
    %574 = vmatprep.subr.mxu0 0.0
    %575 = vmatpush2.msra.mxu0 0.0
    %576 = vmatprep.subr.mxu0 0.0
    %577 = vmatpush2.msra.mxu0 0.0
    %578 = vmatprep.subr.mxu0 0.0
    %579 = vmatpush2.msra.mxu0 0.0
    %580 = vmatprep.subr.mxu0 0.0
    %581 = vmatpush2.msra.mxu0 0.0
    %582 = vmatprep.subr.mxu0 0.0
    %583 = vmatpush2.msra.mxu0 0.0
    %584 = vmatprep.subr.mxu0 0.0
    %585 = vmatpush2.msra.mxu0 0.0
    %586 = vmatprep.subr.mxu0 0.0
    %587 = vmatpush2.msra.mxu0 0.0
    %588 = vmatprep.subr.mxu0 0.0
    %589 = vmatpush2.msra.mxu0 0.0
    %590 = vmatprep.subr.mxu0 0.0
    %591 = vmatpush2.msra.mxu0 0.0
    %592 = vmatprep.subr.mxu0 0.0
    %593 = vmatpush2.msra.mxu0 0.0
    %594 = vmatprep.subr.mxu0 0.0
    %595 = vmatpush2.msra.mxu0 0.0
    %596 = vmatprep.subr.mxu0 0.0
    %597 = vmatpush2.msra.mxu0 0.0
    %598 = vmatprep.mubr.f32.mxu0 0.0
    %599 = vmatmul.mubr.f32.gmra.mxu0 %v532
    %v600 = vpop.f32.mrf.mxu0
    %v601 = vadd.f32 0.0, %v600
    %v602 = vpop.f32.mrf.mxu0
    %603 = vdwg.mxu0
    %v605 = vrot.slane %v601, 3
    %v607 = vadd.f32 %v127, %v605
    %v608 = vtanh.pop %v607
    %vm609 = vcmask 259077
    %610 = vst.msk [vmem:[#allocation2] sm:$0x20] %vm609, %v608
    %v612 = vrot.slane %v608, 5
    %v613 = vsel %vm56, %v612, 0
    %615 = vmatprep.subr.mxu0 0.0
    %616 = vmatpush1.msra.mxu0 0.0
    %617 = vmatprep.subr.mxu0 0.0
    %618 = vmatpush1.msra.mxu0 0.0
    %619 = vmatprep.subr.mxu0 0.0
    %620 = vmatpush1.msra.mxu0 0.0
    %621 = vmatprep.subr.mxu0 0.0
    %622 = vmatpush1.msra.mxu0 0.0
    %623 = vmatprep.subr.mxu0 0.0
    %624 = vmatpush1.msra.mxu0 0.0
    %625 = vmatprep.subr.mxu0 0.0
    %626 = vmatpush1.msra.mxu0 0.0
    %627 = vmatprep.subr.mxu0 0.0
    %628 = vmatpush1.msra.mxu0 0.0
    %629 = vmatprep.subr.mxu0 0.0
    %630 = vmatpush1.msra.mxu0 0.0
    %631 = vmatprep.subr.mxu0 0.0
    %632 = vmatpush1.msra.mxu0 0.0
    %633 = vmatprep.subr.mxu0 0.0
    %634 = vmatpush1.msra.mxu0 0.0
    %635 = vmatprep.subr.mxu0 0.0
    %636 = vmatpush1.msra.mxu0 0.0
    %637 = vmatprep.subr.mxu0 0.0
    %638 = vmatpush1.msra.mxu0 0.0
    %639 = vmatprep.subr.mxu0 0.0
    %640 = vmatpush1.msra.mxu0 %v32
    %641 = vmatprep.subr.mxu0 0.0
    %642 = vmatpush1.msra.mxu0 %v31
    %643 = vmatprep.subr.mxu0 0.0
    %644 = vmatpush1.msra.mxu0 %v30
    %645 = vmatprep.subr.mxu0 0.0
    %646 = vmatpush1.msra.mxu0 %v29
    %647 = vmatprep.subr.mxu0 0.0
    %648 = vmatpush2.msra.mxu0 0.0
    %649 = vmatprep.subr.mxu0 0.0
    %650 = vmatpush2.msra.mxu0 0.0
    %651 = vmatprep.subr.mxu0 0.0
    %652 = vmatpush2.msra.mxu0 0.0
    %653 = vmatprep.subr.mxu0 0.0
    %654 = vmatpush2.msra.mxu0 0.0
    %655 = vmatprep.subr.mxu0 0.0
    %656 = vmatpush2.msra.mxu0 0.0
    %657 = vmatprep.subr.mxu0 0.0
    %658 = vmatpush2.msra.mxu0 0.0
    %659 = vmatprep.subr.mxu0 0.0
    %660 = vmatpush2.msra.mxu0 0.0
    %661 = vmatprep.subr.mxu0 0.0
    %662 = vmatpush2.msra.mxu0 0.0
    %663 = vmatprep.subr.mxu0 0.0
    %664 = vmatpush2.msra.mxu0 0.0
    %665 = vmatprep.subr.mxu0 0.0
    %666 = vmatpush2.msra.mxu0 0.0
    %667 = vmatprep.subr.mxu0 0.0
    %668 = vmatpush2.msra.mxu0 0.0
    %669 = vmatprep.subr.mxu0 0.0
    %670 = vmatpush2.msra.mxu0 0.0
    %671 = vmatprep.subr.mxu0 0.0
    %672 = vmatpush2.msra.mxu0 0.0
    %673 = vmatprep.subr.mxu0 0.0
    %674 = vmatpush2.msra.mxu0 0.0
    %675 = vmatprep.subr.mxu0 0.0
    %676 = vmatpush2.msra.mxu0 0.0
    %677 = vmatprep.subr.mxu0 0.0
    %678 = vmatpush2.msra.mxu0 0.0
    %679 = vmatprep.mubr.f32.mxu0 0.0
    %680 = vmatmul.mubr.f32.gmra.mxu0 %v613
    %v681 = vpop.f32.mrf.mxu0
    %v682 = vadd.f32 0.0, %v681
    %v683 = vpop.f32.mrf.mxu0
    %684 = vdwg.mxu0
    %v686 = vrot.slane %v682, 2
    %v688 = vadd.f32 %v127, %v686
    %v689 = vtanh.pop %v688
    %vm690 = vcmask 260102
    %691 = vst.msk [vmem:[#allocation2] sm:$0x40] %vm690, %v689
    %v693 = vrot.slane %v689, 6
    %v694 = vsel %vm56, %v693, 0
    %696 = vmatprep.subr.mxu0 0.0
    %697 = vmatpush1.msra.mxu0 0.0
    %698 = vmatprep.subr.mxu0 0.0
    %699 = vmatpush1.msra.mxu0 0.0
    %700 = vmatprep.subr.mxu0 0.0
    %701 = vmatpush1.msra.mxu0 0.0
    %702 = vmatprep.subr.mxu0 0.0
    %703 = vmatpush1.msra.mxu0 0.0
    %704 = vmatprep.subr.mxu0 0.0
    %705 = vmatpush1.msra.mxu0 0.0
    %706 = vmatprep.subr.mxu0 0.0
    %707 = vmatpush1.msra.mxu0 0.0
    %708 = vmatprep.subr.mxu0 0.0
    %709 = vmatpush1.msra.mxu0 0.0
    %710 = vmatprep.subr.mxu0 0.0
    %711 = vmatpush1.msra.mxu0 0.0
    %712 = vmatprep.subr.mxu0 0.0
    %713 = vmatpush1.msra.mxu0 0.0
    %714 = vmatprep.subr.mxu0 0.0
    %715 = vmatpush1.msra.mxu0 0.0
    %716 = vmatprep.subr.mxu0 0.0
    %717 = vmatpush1.msra.mxu0 0.0
    %718 = vmatprep.subr.mxu0 0.0
    %719 = vmatpush1.msra.mxu0 0.0
    %720 = vmatprep.subr.mxu0 0.0
    %721 = vmatpush1.msra.mxu0 %v32
    %722 = vmatprep.subr.mxu0 0.0
    %723 = vmatpush1.msra.mxu0 %v31
    %724 = vmatprep.subr.mxu0 0.0
    %725 = vmatpush1.msra.mxu0 %v30
    %726 = vmatprep.subr.mxu0 0.0
    %727 = vmatpush1.msra.mxu0 %v29
    %728 = vmatprep.subr.mxu0 0.0
    %729 = vmatpush2.msra.mxu0 0.0
    %730 = vmatprep.subr.mxu0 0.0
    %731 = vmatpush2.msra.mxu0 0.0
    %732 = vmatprep.subr.mxu0 0.0
    %733 = vmatpush2.msra.mxu0 0.0
    %734 = vmatprep.subr.mxu0 0.0
    %735 = vmatpush2.msra.mxu0 0.0
    %736 = vmatprep.subr.mxu0 0.0
    %737 = vmatpush2.msra.mxu0 0.0
    %738 = vmatprep.subr.mxu0 0.0
    %739 = vmatpush2.msra.mxu0 0.0
    %740 = vmatprep.subr.mxu0 0.0
    %741 = vmatpush2.msra.mxu0 0.0
    %742 = vmatprep.subr.mxu0 0.0
    %743 = vmatpush2.msra.mxu0 0.0
    %744 = vmatprep.subr.mxu0 0.0
    %745 = vmatpush2.msra.mxu0 0.0
    %746 = vmatprep.subr.mxu0 0.0
    %747 = vmatpush2.msra.mxu0 0.0
    %748 = vmatprep.subr.mxu0 0.0
    %749 = vmatpush2.msra.mxu0 0.0
    %750 = vmatprep.subr.mxu0 0.0
    %751 = vmatpush2.msra.mxu0 0.0
    %752 = vmatprep.subr.mxu0 0.0
    %753 = vmatpush2.msra.mxu0 0.0
    %754 = vmatprep.subr.mxu0 0.0
    %755 = vmatpush2.msra.mxu0 0.0
    %756 = vmatprep.subr.mxu0 0.0
    %757 = vmatpush2.msra.mxu0 0.0
    %758 = vmatprep.subr.mxu0 0.0
    %759 = vmatpush2.msra.mxu0 0.0
    %760 = vmatprep.mubr.f32.mxu0 0.0
    %761 = vmatmul.mubr.f32.gmra.mxu0 %v694
    %v762 = vpop.f32.mrf.mxu0
    %v763 = vadd.f32 0.0, %v762
    %v764 = vpop.f32.mrf.mxu0
    %765 = vdwg.mxu0
    %v767 = vrot.slane %v763, 1
    %v769 = vadd.f32 %v127, %v767
    %v770 = vtanh.pop %v769
    %vm771 = vcmask 261127
    %772 = vst.msk [vmem:[#allocation2] sm:$0x80] %vm771, %v770
    %v773 = vld [vmem:[#allocation2] sm:$0xff]
    %v774 = vlaneseq
    %v775 = vshrl.u32 %v774, 7
    %v776 = vsub.s32 0, %v775
    %v777 = vrot.slane %v38, %v776
    %v779 = vsel %vm56, %v773, 0
    %781 = vmatprep.subr.mxu0 0.0
    %782 = vmatpush1.msra.mxu0 0.0
    %783 = vmatprep.subr.mxu0 0.0
    %784 = vmatpush1.msra.mxu0 0.0
    %785 = vmatprep.subr.mxu0 0.0
    %786 = vmatpush1.msra.mxu0 0.0
    %787 = vmatprep.subr.mxu0 0.0
    %788 = vmatpush1.msra.mxu0 0.0
    %789 = vmatprep.subr.mxu0 0.0
    %790 = vmatpush1.msra.mxu0 0.0
    %791 = vmatprep.subr.mxu0 0.0
    %792 = vmatpush1.msra.mxu0 0.0
    %793 = vmatprep.subr.mxu0 0.0
    %794 = vmatpush1.msra.mxu0 0.0
    %795 = vmatprep.subr.mxu0 0.0
    %796 = vmatpush1.msra.mxu0 0.0
    %797 = vmatprep.subr.mxu0 0.0
    %798 = vmatpush1.msra.mxu0 0.0
    %799 = vmatprep.subr.mxu0 0.0
    %800 = vmatpush1.msra.mxu0 0.0
    %801 = vmatprep.subr.mxu0 0.0
    %802 = vmatpush1.msra.mxu0 0.0
    %803 = vmatprep.subr.mxu0 0.0
    %804 = vmatpush1.msra.mxu0 0.0
    %805 = vmatprep.subr.mxu0 0.0
    %806 = vmatpush1.msra.mxu0 %v36
    %807 = vmatprep.subr.mxu0 0.0
    %808 = vmatpush1.msra.mxu0 %v35
    %809 = vmatprep.subr.mxu0 0.0
    %810 = vmatpush1.msra.mxu0 %v34
    %811 = vmatprep.subr.mxu0 0.0
    %812 = vmatpush1.msra.mxu0 %v33
    %813 = vmatprep.subr.mxu0 0.0
    %814 = vmatpush2.msra.mxu0 0.0
    %815 = vmatprep.subr.mxu0 0.0
    %816 = vmatpush2.msra.mxu0 0.0
    %817 = vmatprep.subr.mxu0 0.0
    %818 = vmatpush2.msra.mxu0 0.0
    %819 = vmatprep.subr.mxu0 0.0
    %820 = vmatpush2.msra.mxu0 0.0
    %821 = vmatprep.subr.mxu0 0.0
    %822 = vmatpush2.msra.mxu0 0.0
    %823 = vmatprep.subr.mxu0 0.0
    %824 = vmatpush2.msra.mxu0 0.0
    %825 = vmatprep.subr.mxu0 0.0
    %826 = vmatpush2.msra.mxu0 0.0
    %827 = vmatprep.subr.mxu0 0.0
    %828 = vmatpush2.msra.mxu0 0.0
    %829 = vmatprep.subr.mxu0 0.0
    %830 = vmatpush2.msra.mxu0 0.0
    %831 = vmatprep.subr.mxu0 0.0
    %832 = vmatpush2.msra.mxu0 0.0
    %833 = vmatprep.subr.mxu0 0.0
    %834 = vmatpush2.msra.mxu0 0.0
    %835 = vmatprep.subr.mxu0 0.0
    %836 = vmatpush2.msra.mxu0 0.0
    %837 = vmatprep.subr.mxu0 0.0
    %838 = vmatpush2.msra.mxu0 0.0
    %839 = vmatprep.subr.mxu0 0.0
    %840 = vmatpush2.msra.mxu0 0.0
    %841 = vmatprep.subr.mxu0 0.0
    %842 = vmatpush2.msra.mxu0 0.0
    %843 = vmatprep.subr.mxu0 0.0
    %844 = vmatpush2.msra.mxu0 0.0
    %845 = vmatprep.mubr.f32.mxu0 0.0
    %846 = vmatmul.mubr.f32.gmra.mxu0 %v779
    %v847 = vpop.f32.mrf.mxu0
    %v848 = vadd.f32 %v777, %v847
    %v849 = vpop.f32.mrf.mxu0
    %850 = vdwg.mxu0
    %851 = vmax.xlane.f32.xlu0 %v848
    %v852 = vpop.xlane.xlu0 %851
    %v853 = vsub.f32 %v848, %v852
    %v854 = vmul.f32 %v853, 1.442695
    %v855 = vpow.pop %v854
    %856 = vadd.xlane.f32.xlu0 %v855
    %v857 = vpop.xlane.xlu0 %856
    %v858 = vlog2.pop %v857
    %v859 = vmul.f32 %v858, 0.6931472
    %v860 = vadd.f32 %v852, %v859
    %v861 = vsub.f32 %v848, %v860
    %v862 = vsel %vm56, %v770, 0.0
    %v864 = vrot.slane %v862, 7
    %vm866 = vcmask 1040384
    %v867 = vsel %vm866, %v864, 0.0
    %868 = vst [vmem:[%s2] sm:$0xff] %v861
    %869 = vst [vmem:[%s2 + $0x8] sm:$0xff] %v867
    // Predicated region
    $region14: #{_run_stateless.1} parent=1 // pred_check
      _
    $region15: #{_run_stateless.1} parent=1 // pred_check_branch
      %871 = sbr.rel (0) target = $region17
    $region16: #{_run_stateless.1} parent=1 // pred_region
      _
    $region17: #{_run_stateless.1} parent=1 // pred_fallthru
      _
    // Predicated region
    $region18: #{_run_stateless.1} parent=1 // pred_check
      _
    $region19: #{_run_stateless.1} parent=1 // pred_check_branch
      %873 = sbr.rel (0) target = $region21
    $region20: #{_run_stateless.1} parent=1 // pred_region
      _
    $region21: #{_run_stateless.1} parent=1 // pred_fallthru
      _
    %874 = vsyncpa [#allocation4], 1

</llo_original>
